<compile_context>
chip_gen: v7x
topology: tpu7x:2x2x1
jax: 0.10.0
libtpu: 0.0.40
codegen_flags: <defaults>
</compile_context>

<pallas_src>
import functools

import jax
import jax.numpy as jnp
from jax import lax
from jax.experimental import pallas as pl
from jax.experimental.pallas import tpu as pltpu


def _projection_head_kernel(x_ref, w_ref, b_ref, o_ref, acc_ref, *, inv_hw):
    # x_ref:   (C_in, hw_tile)   one image / one spatial tile (batch dim squeezed)
    # w_ref:   (C_in, out_dim)   conv1x1 weight, transposed once in the wrapper
    # b_ref:   (1, out_dim)
    # o_ref:   (B, out_dim)      resident across the whole grid, stored once
    # acc_ref: (B, out_dim) f32  running sum of relu(conv) over spatial positions
    b = pl.program_id(0)
    t = pl.program_id(1)
    row = pl.ds(b, 1)

    @pl.when(t == 0)
    def _init():
        acc_ref[row, :] = jnp.zeros((1, acc_ref.shape[1]), acc_ref.dtype)

    # 1x1 conv == contraction on C_in; contracting dim 0 of both operands
    # keeps the NCHW layout untouched and still runs on the MXU.
    y = lax.dot_general(
        x_ref[...], w_ref[...],
        dimension_numbers=(((0,), (0,)), ((), ())),
        preferred_element_type=jnp.float32,
    )  # (hw_tile, out_dim)
    y = jnp.maximum(y + b_ref[...], 0.0)                       # bias + ReLU
    acc_ref[row, :] += jnp.sum(y, axis=0, keepdims=True)        # partial spatial sum

    @pl.when(jnp.logical_and(b == pl.num_programs(0) - 1,
                             t == pl.num_programs(1) - 1))
    def _finalize():
        # AdaptiveAvgPool2d((1,1)): scale the accumulated sums by 1/(H*W) and
        # write the full (B, out_dim) slab exactly once.
        o_ref[...] = (acc_ref[...] * inv_hw).astype(o_ref.dtype)


def _choose_hw_tile(hw, c_in, itemsize, max_block_bytes=4 * 1024 * 1024):
    """Largest multiple of 128 dividing hw that keeps the x block <= budget.
    Falls back to the full hw extent (no masking needed) if hw % 128 != 0."""
    if hw % 128 != 0:
        return hw
    cap = max(128, (max_block_bytes // max(c_in * itemsize, 1)) // 128 * 128)
    t = max(128, (min(hw, cap) // 128) * 128)
    while hw % t != 0:
        t -= 128
    return t


def projection_head(x_nchw, weight, bias):
    """
    x_nchw: [B, C_in, H, W]
    weight: [out_dim, C_in]   (nn.Conv2d(C_in, out_dim, 1).weight squeezed)
    bias:   [out_dim]
    returns [B, out_dim]  == relu(conv1x1(x)).mean over (H, W)
    """
    B, C_in, H, W = x_nchw.shape
    out_dim = weight.shape[0]
    HW = H * W

    # Free reshape: NCHW is already contiguous as (B, C_in, H*W). No transpose.
    x = x_nchw.reshape(B, C_in, HW)
    w = weight.T                       # (C_in, out_dim) -- tiny, negligible cost
    b = bias.reshape(1, out_dim)

    hw_tile = _choose_hw_tile(HW, C_in, x.dtype.itemsize)
    n_hw = HW // hw_tile

    x_block_bytes = C_in * hw_tile * x.dtype.itemsize
    w_bytes = C_in * out_dim * w.dtype.itemsize
    # Double-buffered x block + weight/bias + accumulator/output, with headroom.
    # Clamp so the request is legal on v5e (16 MiB scoped default) up to v7x.
    vmem_limit = int(min(48 * 1024 * 1024,
                         max(16 * 1024 * 1024,
                             2 * x_block_bytes + 2 * w_bytes + 2 * 1024 * 1024)))

    kernel = functools.partial(_projection_head_kernel, inv_hw=1.0 / HW)

    return pl.pallas_call(
        kernel,
        out_shape=jax.ShapeDtypeStruct((B, out_dim), x_nchw.dtype),
        grid_spec=pltpu.PrefetchScalarGridSpec(
            num_scalar_prefetch=0,
            grid=(B, n_hw),                        # spatial reduction axis last
            in_specs=[
                # one (C_in, hw_tile) slab of one image; batch dim squeezed away
                pl.BlockSpec((pl.Squeezed(), C_in, hw_tile),
                             lambda i, j: (i, 0, j)),
                pl.BlockSpec((C_in, out_dim), lambda i, j: (0, 0)),
                pl.BlockSpec((1, out_dim), lambda i, j: (0, 0)),
            ],
            # full (B, out_dim) output block, resident in VMEM, stored once
            out_specs=pl.BlockSpec((B, out_dim), lambda i, j: (0, 0)),
            scratch_shapes=[pltpu.VMEM((B, out_dim), jnp.float32)],
        ),
        compiler_params=pltpu.CompilerParams(
            # Both axes "arbitrary": the accumulator + single resident output
            # block require sequential grid execution on one core.
            dimension_semantics=("arbitrary", "arbitrary"),
            vmem_limit_bytes=vmem_limit,
        ),
    )(x, w, b)


if __name__ == "__main__":
    # Small shapes consistent with the module (channels / output_dim scaled down).
    B, C_in, H, W = 2, 4, 16, 16
    out_dim = 32

    key = jax.random.PRNGKey(0)
    kx, kw, kb = jax.random.split(key, 3)

    x = jax.random.normal(kx, (B, C_in, H, W), dtype=jnp.float32)
    weight = jax.random.normal(kw, (out_dim, C_in), dtype=jnp.float32) / (C_in ** 0.5)
    bias = jax.random.normal(kb, (out_dim,), dtype=jnp.float32) * 0.01

    out = jax.block_until_ready(projection_head(x, weight, bias))

    # Pure-JAX reference: conv1x1 -> ReLU -> global avg pool -> flatten
    ref = jnp.einsum("bchw,oc->bohw", x, weight) + bias[None, :, None, None]
    ref = jnp.maximum(ref, 0.0).mean(axis=(2, 3))

    assert out.shape == (B, out_dim)
    assert jnp.allclose(out, ref, atol=1e-5, rtol=1e-5), "mismatch vs reference"
    print("KERNEL_OK")
</pallas_src>

<mosaic_0001>
module attributes {stable_mosaic.version = 11 : i64} {
  func.func @_projection_head_kernel(%arg0: i32, %arg1: i32, %arg2: memref<1x4x256xf32, #tpu.memory_space<vmem>>, %arg3: memref<4x32xf32, #tpu.memory_space<vmem>>, %arg4: memref<1x32xf32, #tpu.memory_space<vmem>>, %arg5: memref<2x32xf32, #tpu.memory_space<vmem>>, %arg6: memref<2x32xf32, #tpu.memory_space<vmem>>) attributes {dimension_semantics = [#tpu.dimension_semantics<arbitrary>, #tpu.dimension_semantics<arbitrary>], iteration_bounds = array<i64: 2, 1>, scalar_prefetch = 0 : i64, scratch_operands = 1 : i64, tpu.core_type = #tpu.core_type<tc>, window_params = [{transform_indices = @transform_0, window_bounds = array<i64: 1, 4, 256>}, {pipeline_mode = #tpu.pipeline_mode<synchronous>, transform_indices = @transform_1, window_bounds = array<i64: 4, 32>}, {pipeline_mode = #tpu.pipeline_mode<synchronous>, transform_indices = @transform_2, window_bounds = array<i64: 1, 32>}, {pipeline_mode = #tpu.pipeline_mode<synchronous>, transform_indices = @transform_3, window_bounds = array<i64: 2, 32>}]} {
    %c0_i32 = arith.constant 0 : i32
    %0 = arith.cmpi eq, %arg1, %c0_i32 : i32
    %1 = arith.extui %0 : i1 to i32
    %c0_i32_0 = arith.constant 0 : i32
    %2 = arith.cmpi ne, %1, %c0_i32_0 : i32
    scf.if %2 {
      %cst_13 = arith.constant 0.000000e+00 : f32
      %24 = vector.broadcast %cst_13 : f32 to vector<1x32xf32>
      %25 = arith.index_cast %arg0 : i32 to index
      %c0_14 = arith.constant 0 : index
      %26 = vector.load %arg6[%25, %c0_14] : memref<2x32xf32, #tpu.memory_space<vmem>>, vector<1x32xf32>
      tpu.vector_store %arg6[%25, %c0_14], %24 {strides = array<i32>} : memref<2x32xf32, #tpu.memory_space<vmem>>, vector<1x32xf32>,
    } else {
    }
    %c0 = arith.constant 0 : index
    %c0_1 = arith.constant 0 : index
    %c0_2 = arith.constant 0 : index
    %3 = vector.load %arg2[%c0, %c0_1, %c0_2] : memref<1x4x256xf32, #tpu.memory_space<vmem>>, vector<1x4x256xf32>
    %4 = vector.shape_cast %3 : vector<1x4x256xf32> to vector<4x256xf32>
    %c0_3 = arith.constant 0 : index
    %c0_4 = arith.constant 0 : index
    %5 = vector.load %arg3[%c0_3, %c0_4] : memref<4x32xf32, #tpu.memory_space<vmem>>, vector<4x32xf32>
    %cst = arith.constant dense<0.000000e+00> : vector<256x32xf32>
    %6 = tpu.matmul %4, %5, %cst {dimension_numbers = #tpu.dot_dimension_numbers<[0], [0], [1], [1], [0, 1, 1, 1], [], []>} : vector<4x256xf32>, vector<4x32xf32>, vector<256x32xf32> -> vector<256x32xf32>
    %c0_5 = arith.constant 0 : index
    %c0_6 = arith.constant 0 : index
    %7 = vector.load %arg4[%c0_5, %c0_6] : memref<1x32xf32, #tpu.memory_space<vmem>>, vector<1x32xf32>
    %8 = vector.broadcast %7 : vector<1x32xf32> to vector<256x32xf32>
    %9 = arith.addf %6, %8 : vector<256x32xf32>
    %cst_7 = arith.constant 0.000000e+00 : f32
    %10 = vector.broadcast %cst_7 : f32 to vector<256x32xf32>
    %11 = arith.maximumf %9, %10 : vector<256x32xf32>
    %12 = arith.index_cast %arg0 : i32 to index
    %c0_8 = arith.constant 0 : index
    %13 = vector.load %arg6[%12, %c0_8] : memref<2x32xf32, #tpu.memory_space<vmem>>, vector<1x32xf32>
    %cst_9 = arith.constant dense<0.000000e+00> : vector<32xf32>
    %14 = vector.multi_reduction <add>, %11, %cst_9 [0] : vector<256x32xf32> to vector<32xf32>
    %15 = vector.shape_cast %14 : vector<32xf32> to vector<1x32xf32>
    %16 = arith.addf %13, %15 : vector<1x32xf32>
    %17 = arith.index_cast %arg0 : i32 to index
    %c0_10 = arith.constant 0 : index
    %18 = vector.load %arg6[%17, %c0_10] : memref<2x32xf32, #tpu.memory_space<vmem>>, vector<1x32xf32>
    tpu.vector_store %arg6[%17, %c0_10], %16 {strides = array<i32>} : memref<2x32xf32, #tpu.memory_space<vmem>>, vector<1x32xf32>,
    %c1_i32 = arith.constant 1 : i32
    %19 = arith.cmpi eq, %arg0, %c1_i32 : i32
    %c0_i32_11 = arith.constant 0 : i32
    %20 = arith.cmpi eq, %arg1, %c0_i32_11 : i32
    %21 = arith.andi %19, %20 : i1
    %22 = arith.extui %21 : i1 to i32
    %c0_i32_12 = arith.constant 0 : i32
    %23 = arith.cmpi ne, %22, %c0_i32_12 : i32
    scf.if %23 {
      %c0_13 = arith.constant 0 : index
      %c0_14 = arith.constant 0 : index
      %24 = vector.load %arg6[%c0_13, %c0_14] : memref<2x32xf32, #tpu.memory_space<vmem>>, vector<2x32xf32>
      %cst_15 = arith.constant 3.906250e-03 : f32
      %25 = vector.broadcast %cst_15 : f32 to vector<2x32xf32>
      %26 = arith.mulf %24, %25 : vector<2x32xf32>
      %c0_16 = arith.constant 0 : index
      %c0_17 = arith.constant 0 : index
      %27 = vector.load %arg5[%c0_16, %c0_17] : memref<2x32xf32, #tpu.memory_space<vmem>>, vector<2x32xf32>
      tpu.vector_store %arg5[%c0_16, %c0_17], %26 {strides = array<i32>} : memref<2x32xf32, #tpu.memory_space<vmem>>, vector<2x32xf32>,
    } else {
    }
    return
  }
  func.func @transform_0(%arg0: i32, %arg1: i32) -> (i32, i32, i32) {
    %c0_i32 = arith.constant 0 : i32
    %c0_i32_0 = arith.constant 0 : i32
    return %arg0, %c0_i32, %arg1 : i32, i32, i32
  }
  func.func @transform_1(%arg0: i32, %arg1: i32) -> (i32, i32) {
    %c0_i32 = arith.constant 0 : i32
    %c0_i32_0 = arith.constant 0 : i32
    %c0_i32_1 = arith.constant 0 : i32
    return %c0_i32, %c0_i32_0 : i32, i32
  }
  func.func @transform_2(%arg0: i32, %arg1: i32) -> (i32, i32) {
    %c0_i32 = arith.constant 0 : i32
    %c0_i32_0 = arith.constant 0 : i32
    %c0_i32_1 = arith.constant 0 : i32
    return %c0_i32, %c0_i32_0 : i32, i32
  }
  func.func @transform_3(%arg0: i32, %arg1: i32) -> (i32, i32) {
    %c0_i32 = arith.constant 0 : i32
    %c0_i32_0 = arith.constant 0 : i32
    %c0_i32_1 = arith.constant 0 : i32
    return %c0_i32, %c0_i32_0 : i32, i32
  }
}

</mosaic_0001>

<llo_original>
// kernel: tpu_custom_call.1
$region0: #{tpu_custom_call.1}
  #allocation0 [shape = 'u32[]', space=smem, size = 0x4, offset = 0x4, fixed_abs, tag = 'smem constant byte address 0x4 - core index']
  #allocation1 [shape = 'u32[144,128]{1,0:T(1,128)}', space=vmem, size = 0x12000, scoped, tag = 'internal scratch']
  #allocation2 [shape = 'f32[2,32]{1,0:T(2,128)}', space=vmem, size = 0x400, scoped, tag = 'scratch operand']
  %s0 = inlined_call_operand.hbm [shape: f32[2,4,256], index: 0, kind: input, shape index: {}]
  %s1 = inlined_call_operand.hbm [shape: f32[4,32], index: 1, kind: input, shape index: {}]
  %s2 = inlined_call_operand.vmem [shape: f32[1,32], index: 2, kind: input, shape index: {}]
  %s3 = inlined_call_operand.hbm [shape: f32[2,32], index: 3, kind: output, shape index: {}]
  %s4 = sld [smem:[#allocation0]]
  $region61: #{tpu_custom_call.1} parent=0
    _
  %s6 = ssub.s32 1, %s4
  %s7 = scalar_select 0, %s6, %s4
  $region1: #{tpu_custom_call.1} parent=0
    #allocation3 [shape = 'u8[8192]{0}', space=vmem, size = 0x2000, scoped, tag = 'input window, operand 0']
    #allocation4 [shape = 's32[2]{0}', space=sflag, size = 0x8, scoped, tag = 'scoped memory for tpu_custom_call.1']
    #allocation5 [shape = 's32[2]{0}', space=sflag, size = 0x8, scoped, tag = 'scoped memory for tpu_custom_call.1']
    #allocation6 [shape = 'u8[2048]{0}', space=vmem, size = 0x800, scoped, tag = 'input window, operand 1, single buffered']
    #allocation7 [shape = 's32[1]{0}', space=sflag, size = 0x4, scoped, tag = 'scoped memory for tpu_custom_call.1']
    #allocation8 [shape = 'u8[1024]{0}', space=vmem, size = 0x400, scoped, tag = 'output window, operand 0, single buffered']
    %8 = vsyncpa [#allocation4], 0
    %s9 = scalar_lea.sflag [#allocation4], 1
    %10 = vsyncpa %s9, 0
    %11 = vsyncpa [#allocation7], 0
    %12 = vsyncpa [#allocation5], 0
    loop: start=0, step=1, limit=4
    $region2: #{tpu_custom_call.1} parent=1 // loop_pre_header
      _
    $region3: #{tpu_custom_call.1} parent=1 // loop_header
      %s14 = sphi 0, %s18
      %p15 = scmp.ge.s32.totalorder %s14, 4
      %s21 = sphi 0, %s33
      %s22 = sphi 0, %s29
      %s23 = sphi 0, %s21
      %s24 = sphi 0, %s22
      %s25 = sphi 0, %s23
      %s26 = sphi 0, %s24
      %s38 = sphi 0, %s40
      %s41 = sphi 0, %s38
      %s42 = sphi 0, %s41
      %s58 = sphi 0, %s42
      %s62 = sphi 0, %s62
      %s64 = sphi 0, %s62
      %s65 = sphi 0, %s64
      %s79 = sphi 0, %s65
      %s83 = sphi 0, %s83
      %s85 = sphi 0, %s83
      %s86 = sphi 0, %s85
      %s100 = sphi 0, %s86
      %s104 = sphi 0, %s104
      %s106 = sphi 0, %s104
      %s107 = sphi 0, %s106
      %s121 = sphi 0, %s107
    $region4: #{tpu_custom_call.1} parent=1 // loop_header_branch
      %17 = sbr.rel (%p15) target = $region8
    $region5: #{tpu_custom_call.1} parent=1 // loop_body
      %s19 = ssub.s32 %s14, 1
      %s20 = ssub.s32 %s14, 2
      %s27 = sadd.s32 1, %s22
      %p28 = scmp.ge.s32.totalorder %s27, 1
      %s29 = scalar_select %p28, 0, %s27
      %s30 = sadd.s32 1, %s21
      %s31 = scalar_select %p28, %s30, %s21
      %p32 = scmp.ge.s32.totalorder %s31, 2
      %s33 = scalar_select %p32, 0, %s31
      %s34 = ssub.s32 %s21, %s33
      %s35 = ssub.s32 %s22, %s29
      %s36 = sor.u32 %s34, %s35
      %p37 = scmp.eq.s32.totalorder %s36, 0
      %s39 = sadd.s32 %s38, 1
      %s40 = scalar_select %p37, %s38, %s39
      %p43 = pneg %p37
      %p44 = scmp.eq.s32.totalorder %s14, 1
      %p45 = por %p43, %p44
      %p46 = scmp.ne.s32.totalorder %s38, %s41
      %p47 = scmp.eq.s32.totalorder %s14, 0
      %p48 = por %p46, %p47
      %p49 = scmp.ne.s32.totalorder %s38, %s41
      %p50 = scmp.eq.s32.totalorder %s19, 1
      %p51 = por %p49, %p50
      %p52 = scmp.ne.s32.totalorder %s41, %s42
      %p53 = scmp.eq.s32.totalorder %s19, 0
      %p54 = por %p52, %p53
      %p55 = scmp.ne.s32.totalorder %s41, %s42
      %p56 = scmp.eq.s32.totalorder %s20, 1
      %p57 = por %p55, %p56
      %p59 = scmp.ne.s32.totalorder %s42, %s58
      %p60 = scmp.eq.s32.totalorder %s20, 0
      %p61 = por %p59, %p60
      %s63 = sadd.s32 %s62, 1
      %p66 = scmp.eq.s32.totalorder %s14, 1
      %p67 = scmp.ne.s32.totalorder %s62, %s64
      %p68 = scmp.eq.s32.totalorder %s14, 0
      %p69 = por %p67, %p68
      %p70 = scmp.ne.s32.totalorder %s62, %s64
      %p71 = scmp.eq.s32.totalorder %s19, 1
      %p72 = por %p70, %p71
      %p73 = scmp.ne.s32.totalorder %s64, %s65
      %p74 = scmp.eq.s32.totalorder %s19, 0
      %p75 = por %p73, %p74
      %p76 = scmp.ne.s32.totalorder %s64, %s65
      %p77 = scmp.eq.s32.totalorder %s20, 1
      %p78 = por %p76, %p77
      %p80 = scmp.ne.s32.totalorder %s65, %s79
      %p81 = scmp.eq.s32.totalorder %s20, 0
      %p82 = por %p80, %p81
      %s84 = sadd.s32 %s83, 1
      %p87 = scmp.eq.s32.totalorder %s14, 1
      %p88 = scmp.ne.s32.totalorder %s83, %s85
      %p89 = scmp.eq.s32.totalorder %s14, 0
      %p90 = por %p88, %p89
      %p91 = scmp.ne.s32.totalorder %s83, %s85
      %p92 = scmp.eq.s32.totalorder %s19, 1
      %p93 = por %p91, %p92
      %p94 = scmp.ne.s32.totalorder %s85, %s86
      %p95 = scmp.eq.s32.totalorder %s19, 0
      %p96 = por %p94, %p95
      %p97 = scmp.ne.s32.totalorder %s85, %s86
      %p98 = scmp.eq.s32.totalorder %s20, 1
      %p99 = por %p97, %p98
      %p101 = scmp.ne.s32.totalorder %s86, %s100
      %p102 = scmp.eq.s32.totalorder %s20, 0
      %p103 = por %p101, %p102
      %s105 = sadd.s32 %s104, 1
      %p108 = scmp.eq.s32.totalorder %s14, 1
      %p109 = scmp.ne.s32.totalorder %s104, %s106
      %p110 = scmp.eq.s32.totalorder %s14, 0
      %p111 = por %p109, %p110
      %p112 = scmp.ne.s32.totalorder %s104, %s106
      %p113 = scmp.eq.s32.totalorder %s19, 1
      %p114 = por %p112, %p113
      %p115 = scmp.ne.s32.totalorder %s106, %s107
      %p116 = scmp.eq.s32.totalorder %s19, 0
      %p117 = por %p115, %p116
      %p118 = scmp.ne.s32.totalorder %s106, %s107
      %p119 = scmp.eq.s32.totalorder %s20, 1
      %p120 = por %p118, %p119
      %p122 = scmp.ne.s32.totalorder %s107, %s121
      %p123 = scmp.eq.s32.totalorder %s20, 0
      %p124 = por %p122, %p123
      %p125 = scmp.le.s32.totalorder 1, %s14
      %p126 = scmp.lt.s32.totalorder %s14, 3
      %p127 = pnand %p125, %p126
      %p128 = pneg %p127
      // Predicated region
      $region9: #{tpu_custom_call.1} parent=5 // pred_check
        _
      $region10: #{tpu_custom_call.1} parent=5 // pred_check_branch
        %130 = sbr.rel (%p127) target = $region12
      $region11: #{tpu_custom_call.1} parent=5 // pred_region
        %s131 = ssub.s32 %s14, 1
        // Predicated region
        $region13: #{tpu_custom_call.1} parent=11 // pred_check
          %p132 = pneg %p75
        $region14: #{tpu_custom_call.1} parent=11 // pred_check_branch
          %134 = sbr.rel (%p132) target = $region16
        $region15: #{tpu_custom_call.1} parent=11 // pred_region
          %s136 = ssub.s32 64, 64
          %137 = vsyncadd [#allocation7], %s136
          %s139 = sshll.u32 [#allocation6], 4
          %s140 = int_to_ptr.vmem [resolvable:$true] %s139
          %142 = dma.hbm_to_vmem [thread:$0]  %s1, 64, %s140, [#allocation7]
        $region16: #{tpu_custom_call.1} parent=11 // pred_fallthru
          _
        // Predicated region
        $region17: #{tpu_custom_call.1} parent=11 // pred_check
          %p143 = pneg %p96
        $region18: #{tpu_custom_call.1} parent=11 // pred_check_branch
          %145 = sbr.rel (%p143) target = $region20
        $region19: #{tpu_custom_call.1} parent=11 // pred_region
          _
        $region20: #{tpu_custom_call.1} parent=11 // pred_fallthru
          _
      $region12: #{tpu_custom_call.1} parent=5 // pred_fallthru
        _
      %p146 = scmp.lt.s32.totalorder %s14, 2
      // Predicated region
      $region21: #{tpu_custom_call.1} parent=5 // pred_check
        %p147 = pneg %p146
      $region22: #{tpu_custom_call.1} parent=5 // pred_check_branch
        %149 = sbr.rel (%p147) target = $region24
      $region23: #{tpu_custom_call.1} parent=5 // pred_region
        // Predicated region
        $region25: #{tpu_custom_call.1} parent=23 // pred_check
          %p150 = pneg %p48
        $region26: #{tpu_custom_call.1} parent=23 // pred_check_branch
          %152 = sbr.rel (%p150) target = $region28
        $region27: #{tpu_custom_call.1} parent=23 // pred_region
          %s153 = sand.u32 %s38, 1
          %s154 = scalar_lea.sflag [#allocation4], %s153
          %s155 = sand.u32 %s38, 1
          %s156 = smul.addr %s155, 8
          %s157 = scalar_lea.vmem [#allocation3], %s156
          %s158 = smul.u32 2, %s22
          %s160 = ssub.s32 128, 128
          %161 = vsyncadd %s154, %s160
          %s162 = smul.addr %s21, 2
          %s163 = sadd.s32 %s158, %s162
          %s164 = smul.addr %s163, 64
          %s165 = scalar_lea.hbm %s0, %s164
          %s167 = sshll.u32 %s157, 4
          %s168 = int_to_ptr.vmem [resolvable:$true] %s167
          %170 = dma.hbm_to_vmem [thread:$0]  %s165, 128, %s168, %s154
        $region28: #{tpu_custom_call.1} parent=23 // pred_fallthru
          _
      $region24: #{tpu_custom_call.1} parent=5 // pred_fallthru
        _
      %p171 = scmp.le.s32.totalorder 1, %s14
      %p172 = scmp.lt.s32.totalorder %s14, 3
      %p173 = pnand %p171, %p172
      %p174 = pneg %p173
      // Predicated region
      $region29: #{tpu_custom_call.1} parent=5 // pred_check
        _
      $region30: #{tpu_custom_call.1} parent=5 // pred_check_branch
        %176 = sbr.rel (%p173) target = $region32
      $region31: #{tpu_custom_call.1} parent=5 // pred_region
        %s177 = ssub.s32 %s14, 1
        %s178 = sand.u32 %s41, 1
        %s179 = scalar_lea.sflag [#allocation4], %s178
        %s180 = sand.u32 %s41, 1
        %s181 = smul.addr %s180, 8
        %s182 = scalar_lea.vmem [#allocation3], %s181
        // Predicated region
        $region33: #{tpu_custom_call.1} parent=31 // pred_check
          %p183 = pneg %p54
        $region34: #{tpu_custom_call.1} parent=31 // pred_check_branch
          %185 = sbr.rel (%p183) target = $region36
        $region35: #{tpu_custom_call.1} parent=31 // pred_region
          %186 = dma.done %s179, 128
        $region36: #{tpu_custom_call.1} parent=31 // pred_fallthru
          _
        // Predicated region
        $region37: #{tpu_custom_call.1} parent=31 // pred_check
          %p187 = pneg %p75
        $region38: #{tpu_custom_call.1} parent=31 // pred_check_branch
          %189 = sbr.rel (%p187) target = $region40
        $region39: #{tpu_custom_call.1} parent=31 // pred_region
          %190 = dma.done [#allocation7], 64
        $region40: #{tpu_custom_call.1} parent=31 // pred_fallthru
          _
        %s191 = sand.u32 %s41, 1
        %s192 = scalar_lea.sflag [#allocation4], %s191
        %s193 = sand.u32 %s41, 1
        %s194 = smul.addr %s193, 8
        %s195 = scalar_lea.vmem [#allocation3], %s194
        %p196 = pneg %p54
        %p197 = pneg %p51
        %p198 = pneg %p75
        %p199 = pneg %p72
        %p200 = pneg %p96
        %p201 = pneg %p93
        %p202 = pneg %p117
        %p203 = pneg %p114
        %s204 = smul.u32 2, %s24
        %p205 = scmp.eq.s32.totalorder %s24, 0
        // Predicated region
        $region41: #{tpu_custom_call.1} parent=31 // pred_check
          %p206 = pneg %p205
        $region42: #{tpu_custom_call.1} parent=31 // pred_check_branch
          %208 = sbr.rel (%p206) target = $region44
        $region43: #{tpu_custom_call.1} parent=31 // pred_region
          %s209 = scalar_lea.vmem [#allocation2], %s23
          %vm210 = vcmask 253952
          %211 = vst.msk [vmem:[%s209] sm:$0x1] %vm210, 0.0
        $region44: #{tpu_custom_call.1} parent=31 // pred_fallthru
          _
        %v212 = vld [vmem:[%s182] sm:$0xff]
        %v213 = vld [vmem:[#allocation6] sm:$0xf]
        %v214 = vld [vmem:[%s2] sm:$0x1]
        %v216 = vlaneseq
        %v217 = vshrl.u32 %v216, 7
        %v218 = vsub.s32 0, %v217
        %v219 = vrot.slane %v214, %v218
        %v222 = vcombine.high %v212, %v212
        %224 = vxpose.xlu0.b32.start [1/16] %v212, 128
        %225 = vxpose.xlu0.b32.cont [2/16] 0.0, 128
        %226 = vxpose.xlu0.b32.cont [3/16] 0.0, 128
        %227 = vxpose.xlu0.b32.cont [4/16] 0.0, 128
        %228 = vxpose.xlu0.b32.cont [5/16] 0.0, 128
        %229 = vxpose.xlu0.b32.cont [6/16] 0.0, 128
        %230 = vxpose.xlu0.b32.cont [7/16] 0.0, 128
        %231 = vxpose.xlu0.b32.cont [8/16] 0.0, 128
        %232 = vxpose.xlu0.b32.cont [9/16] 0.0, 128
        %233 = vxpose.xlu0.b32.cont [10/16] 0.0, 128
        %234 = vxpose.xlu0.b32.cont [11/16] 0.0, 128
        %235 = vxpose.xlu0.b32.cont [12/16] 0.0, 128
        %236 = vxpose.xlu0.b32.cont [13/16] 0.0, 128
        %237 = vxpose.xlu0.b32.cont [14/16] 0.0, 128
        %238 = vxpose.xlu0.b32.cont [15/16] 0.0, 128
        %239 = vxpose.xlu0.b32.end [16/16] 0.0, 128
        %v240 = vpop.trf.xlu0
        %v241 = vpop.trf.xlu0
        %v242 = vpop.trf.xlu0
        %v243 = vpop.trf.xlu0
        %v244 = vpop.trf.xlu0
        %v245 = vpop.trf.xlu0
        %v246 = vpop.trf.xlu0
        %v247 = vpop.trf.xlu0
        %v248 = vpop.trf.xlu0
        %v249 = vpop.trf.xlu0
        %v250 = vpop.trf.xlu0
        %v251 = vpop.trf.xlu0
        %v252 = vpop.trf.xlu0
        %v253 = vpop.trf.xlu0
        %v254 = vpop.trf.xlu0
        %v255 = vpop.trf.xlu0
        %256 = vxpose.xlu0.b32.start [1/16] %v222, 128
        %257 = vxpose.xlu0.b32.cont [2/16] 0.0, 128
        %258 = vxpose.xlu0.b32.cont [3/16] 0.0, 128
        %259 = vxpose.xlu0.b32.cont [4/16] 0.0, 128
        %260 = vxpose.xlu0.b32.cont [5/16] 0.0, 128
        %261 = vxpose.xlu0.b32.cont [6/16] 0.0, 128
        %262 = vxpose.xlu0.b32.cont [7/16] 0.0, 128
        %263 = vxpose.xlu0.b32.cont [8/16] 0.0, 128
        %264 = vxpose.xlu0.b32.cont [9/16] 0.0, 128
        %265 = vxpose.xlu0.b32.cont [10/16] 0.0, 128
        %266 = vxpose.xlu0.b32.cont [11/16] 0.0, 128
        %267 = vxpose.xlu0.b32.cont [12/16] 0.0, 128
        %268 = vxpose.xlu0.b32.cont [13/16] 0.0, 128
        %269 = vxpose.xlu0.b32.cont [14/16] 0.0, 128
        %270 = vxpose.xlu0.b32.cont [15/16] 0.0, 128
        %271 = vxpose.xlu0.b32.end [16/16] 0.0, 128
        %v272 = vpop.trf.xlu0
        %v273 = vpop.trf.xlu0
        %v274 = vpop.trf.xlu0
        %v275 = vpop.trf.xlu0
        %v276 = vpop.trf.xlu0
        %v277 = vpop.trf.xlu0
        %v278 = vpop.trf.xlu0
        %v279 = vpop.trf.xlu0
        %v280 = vpop.trf.xlu0
        %v281 = vpop.trf.xlu0
        %v282 = vpop.trf.xlu0
        %v283 = vpop.trf.xlu0
        %v284 = vpop.trf.xlu0
        %v285 = vpop.trf.xlu0
        %v286 = vpop.trf.xlu0
        %v287 = vpop.trf.xlu0
        %vm288 = vcmask 31744
        %v290 = vsel %vm288, %v240, 0
        %v293 = vsel %vm288, %v241, 0
        %v296 = vsel %vm288, %v242, 0
        %v299 = vsel %vm288, %v243, 0
        %v302 = vsel %vm288, %v244, 0
        %v305 = vsel %vm288, %v245, 0
        %v308 = vsel %vm288, %v246, 0
        %v311 = vsel %vm288, %v247, 0
        %v314 = vsel %vm288, %v248, 0
        %v317 = vsel %vm288, %v249, 0
        %v320 = vsel %vm288, %v250, 0
        %v323 = vsel %vm288, %v251, 0
        %v326 = vsel %vm288, %v252, 0
        %v329 = vsel %vm288, %v253, 0
        %v332 = vsel %vm288, %v254, 0
        %v335 = vsel %vm288, %v255, 0
        %v338 = vsel %vm288, %v272, 0
        %v341 = vsel %vm288, %v273, 0
        %v344 = vsel %vm288, %v274, 0
        %v347 = vsel %vm288, %v275, 0
        %v350 = vsel %vm288, %v276, 0
        %v353 = vsel %vm288, %v277, 0
        %v356 = vsel %vm288, %v278, 0
        %v359 = vsel %vm288, %v279, 0
        %v362 = vsel %vm288, %v280, 0
        %v365 = vsel %vm288, %v281, 0
        %v368 = vsel %vm288, %v282, 0
        %v371 = vsel %vm288, %v283, 0
        %v374 = vsel %vm288, %v284, 0
        %v377 = vsel %vm288, %v285, 0
        %v380 = vsel %vm288, %v286, 0
        %v383 = vsel %vm288, %v287, 0
        %vm385 = vcmask 1043456
        %v387 = vsel %vm385, %v213, 0
        %389 = vmatprep.subr.mxu0 0.0
        %390 = vmatpush1.msra.mxu0 %v387
        %391 = vmatprep.subr.mxu0 0.0
        %392 = vmatpush1.msra.mxu0 0.0
        %393 = vmatprep.subr.mxu0 0.0
        %394 = vmatpush1.msra.mxu0 0.0
        %395 = vmatprep.subr.mxu0 0.0
        %396 = vmatpush1.msra.mxu0 0.0
        %397 = vmatprep.subr.mxu0 0.0
        %398 = vmatpush1.msra.mxu0 0.0
        %399 = vmatprep.subr.mxu0 0.0
        %400 = vmatpush1.msra.mxu0 0.0
        %401 = vmatprep.subr.mxu0 0.0
        %402 = vmatpush1.msra.mxu0 0.0
        %403 = vmatprep.subr.mxu0 0.0
        %404 = vmatpush1.msra.mxu0 0.0
        %405 = vmatprep.subr.mxu0 0.0
        %406 = vmatpush1.msra.mxu0 0.0
        %407 = vmatprep.subr.mxu0 0.0
        %408 = vmatpush1.msra.mxu0 0.0
        %409 = vmatprep.subr.mxu0 0.0
        %410 = vmatpush1.msra.mxu0 0.0
        %411 = vmatprep.subr.mxu0 0.0
        %412 = vmatpush1.msra.mxu0 0.0
        %413 = vmatprep.subr.mxu0 0.0
        %414 = vmatpush1.msra.mxu0 0.0
        %415 = vmatprep.subr.mxu0 0.0
        %416 = vmatpush1.msra.mxu0 0.0
        %417 = vmatprep.subr.mxu0 0.0
        %418 = vmatpush1.msra.mxu0 0.0
        %419 = vmatprep.subr.mxu0 0.0
        %420 = vmatpush1.msra.mxu0 0.0
        %421 = vmatprep.subr.mxu0 0.0
        %422 = vmatpush1.msra.mxu0 0.0
        %423 = vmatprep.subr.mxu0 0.0
        %424 = vmatpush1.msra.mxu0 0.0
        %425 = vmatprep.subr.mxu0 0.0
        %426 = vmatpush1.msra.mxu0 0.0
        %427 = vmatprep.subr.mxu0 0.0
        %428 = vmatpush1.msra.mxu0 0.0
        %429 = vmatprep.subr.mxu0 0.0
        %430 = vmatpush1.msra.mxu0 0.0
        %431 = vmatprep.subr.mxu0 0.0
        %432 = vmatpush1.msra.mxu0 0.0
        %433 = vmatprep.subr.mxu0 0.0
        %434 = vmatpush1.msra.mxu0 0.0
        %435 = vmatprep.subr.mxu0 0.0
        %436 = vmatpush1.msra.mxu0 0.0
        %437 = vmatprep.subr.mxu0 0.0
        %438 = vmatpush1.msra.mxu0 0.0
        %439 = vmatprep.subr.mxu0 0.0
        %440 = vmatpush1.msra.mxu0 0.0
        %441 = vmatprep.subr.mxu0 0.0
        %442 = vmatpush1.msra.mxu0 0.0
        %443 = vmatprep.subr.mxu0 0.0
        %444 = vmatpush1.msra.mxu0 0.0
        %445 = vmatprep.subr.mxu0 0.0
        %446 = vmatpush1.msra.mxu0 0.0
        %447 = vmatprep.subr.mxu0 0.0
        %448 = vmatpush1.msra.mxu0 0.0
        %449 = vmatprep.subr.mxu0 0.0
        %450 = vmatpush1.msra.mxu0 0.0
        %451 = vmatprep.subr.mxu0 0.0
        %452 = vmatpush1.msra.mxu0 0.0
        %453 = vmatprep.mubr.f32.mxu0 0.0
        %454 = vmatmul.mubr.f32.gmra.mrb[0].mxu0 %v290
        %v455 = vpop.f32.mrb[0].mxu0
        %v456 = vadd.f32 %v219, %v455
        %v457 = vpop.f32.mrb[0].mxu0
        %458 = vmatprep.mubr.f32.mxu0 0.0
        %459 = vmatmul.mubr.f32.gmra.mrb[0].mxu0 %v293
        %v460 = vpop.f32.mrb[0].mxu0
        %v461 = vadd.f32 %v219, %v460
        %v462 = vpop.f32.mrb[0].mxu0
        %463 = vmatprep.mubr.f32.mxu0 0.0
        %464 = vmatmul.mubr.f32.gmra.mrb[0].mxu0 %v296
        %v465 = vpop.f32.mrb[0].mxu0
        %v466 = vadd.f32 %v219, %v465
        %v467 = vpop.f32.mrb[0].mxu0
        %468 = vmatprep.mubr.f32.mxu0 0.0
        %469 = vmatmul.mubr.f32.gmra.mrb[0].mxu0 %v299
        %v470 = vpop.f32.mrb[0].mxu0
        %v471 = vadd.f32 %v219, %v470
        %v472 = vpop.f32.mrb[0].mxu0
        %473 = vmatprep.mubr.f32.mxu0 0.0
        %474 = vmatmul.mubr.f32.gmra.mrb[0].mxu0 %v302
        %v475 = vpop.f32.mrb[0].mxu0
        %v476 = vadd.f32 %v219, %v475
        %v477 = vpop.f32.mrb[0].mxu0
        %478 = vmatprep.mubr.f32.mxu0 0.0
        %479 = vmatmul.mubr.f32.gmra.mrb[0].mxu0 %v305
        %v480 = vpop.f32.mrb[0].mxu0
        %v481 = vadd.f32 %v219, %v480
        %v482 = vpop.f32.mrb[0].mxu0
        %483 = vmatprep.mubr.f32.mxu0 0.0
        %484 = vmatmul.mubr.f32.gmra.mrb[0].mxu0 %v308
        %v485 = vpop.f32.mrb[0].mxu0
        %v486 = vadd.f32 %v219, %v485
        %v487 = vpop.f32.mrb[0].mxu0
        %488 = vmatprep.mubr.f32.mxu0 0.0
        %489 = vmatmul.mubr.f32.gmra.mrb[0].mxu0 %v311
        %v490 = vpop.f32.mrb[0].mxu0
        %v491 = vadd.f32 %v219, %v490
        %v492 = vpop.f32.mrb[0].mxu0
        %493 = vmatprep.mubr.f32.mxu0 0.0
        %494 = vmatmul.mubr.f32.gmra.mrb[0].mxu0 %v314
        %v495 = vpop.f32.mrb[0].mxu0
        %v496 = vadd.f32 %v219, %v495
        %v497 = vpop.f32.mrb[0].mxu0
        %498 = vmatprep.mubr.f32.mxu0 0.0
        %499 = vmatmul.mubr.f32.gmra.mrb[0].mxu0 %v317
        %v500 = vpop.f32.mrb[0].mxu0
        %v501 = vadd.f32 %v219, %v500
        %v502 = vpop.f32.mrb[0].mxu0
        %503 = vmatprep.mubr.f32.mxu0 0.0
        %504 = vmatmul.mubr.f32.gmra.mrb[0].mxu0 %v320
        %v505 = vpop.f32.mrb[0].mxu0
        %v506 = vadd.f32 %v219, %v505
        %v507 = vpop.f32.mrb[0].mxu0
        %508 = vmatprep.mubr.f32.mxu0 0.0
        %509 = vmatmul.mubr.f32.gmra.mrb[0].mxu0 %v323
        %v510 = vpop.f32.mrb[0].mxu0
        %v511 = vadd.f32 %v219, %v510
        %v512 = vpop.f32.mrb[0].mxu0
        %513 = vmatprep.mubr.f32.mxu0 0.0
        %514 = vmatmul.mubr.f32.gmra.mrb[0].mxu0 %v326
        %v515 = vpop.f32.mrb[0].mxu0
        %v516 = vadd.f32 %v219, %v515
        %v517 = vpop.f32.mrb[0].mxu0
        %518 = vmatprep.mubr.f32.mxu0 0.0
        %519 = vmatmul.mubr.f32.gmra.mrb[0].mxu0 %v329
        %v520 = vpop.f32.mrb[0].mxu0
        %v521 = vadd.f32 %v219, %v520
        %v522 = vpop.f32.mrb[0].mxu0
        %523 = vmatprep.mubr.f32.mxu0 0.0
        %524 = vmatmul.mubr.f32.gmra.mrb[0].mxu0 %v332
        %v525 = vpop.f32.mrb[0].mxu0
        %v526 = vadd.f32 %v219, %v525
        %v527 = vpop.f32.mrb[0].mxu0
        %528 = vmatprep.mubr.f32.mxu0 0.0
        %529 = vmatmul.mubr.f32.gmra.mrb[0].mxu0 %v335
        %v530 = vpop.f32.mrb[0].mxu0
        %v531 = vadd.f32 %v219, %v530
        %v532 = vpop.f32.mrb[0].mxu0
        %533 = vmatprep.mubr.f32.mxu0 0.0
        %534 = vmatmul.mubr.f32.gmra.mrb[0].mxu0 %v338
        %v535 = vpop.f32.mrb[0].mxu0
        %v536 = vadd.f32 %v219, %v535
        %v537 = vpop.f32.mrb[0].mxu0
        %538 = vmatprep.mubr.f32.mxu0 0.0
        %539 = vmatmul.mubr.f32.gmra.mrb[0].mxu0 %v341
        %v540 = vpop.f32.mrb[0].mxu0
        %v541 = vadd.f32 %v219, %v540
        %v542 = vpop.f32.mrb[0].mxu0
        %543 = vmatprep.mubr.f32.mxu0 0.0
        %544 = vmatmul.mubr.f32.gmra.mrb[0].mxu0 %v344
        %v545 = vpop.f32.mrb[0].mxu0
        %v546 = vadd.f32 %v219, %v545
        %v547 = vpop.f32.mrb[0].mxu0
        %548 = vmatprep.mubr.f32.mxu0 0.0
        %549 = vmatmul.mubr.f32.gmra.mrb[0].mxu0 %v347
        %v550 = vpop.f32.mrb[0].mxu0
        %v551 = vadd.f32 %v219, %v550
        %v552 = vpop.f32.mrb[0].mxu0
        %553 = vmatprep.mubr.f32.mxu0 0.0
        %554 = vmatmul.mubr.f32.gmra.mrb[0].mxu0 %v350
        %v555 = vpop.f32.mrb[0].mxu0
        %v556 = vadd.f32 %v219, %v555
        %v557 = vpop.f32.mrb[0].mxu0
        %558 = vmatprep.mubr.f32.mxu0 0.0
        %559 = vmatmul.mubr.f32.gmra.mrb[0].mxu0 %v353
        %v560 = vpop.f32.mrb[0].mxu0
        %v561 = vadd.f32 %v219, %v560
        %v562 = vpop.f32.mrb[0].mxu0
        %563 = vmatprep.mubr.f32.mxu0 0.0
        %564 = vmatmul.mubr.f32.gmra.mrb[0].mxu0 %v356
        %v565 = vpop.f32.mrb[0].mxu0
        %v566 = vadd.f32 %v219, %v565
        %v567 = vpop.f32.mrb[0].mxu0
        %568 = vmatprep.mubr.f32.mxu0 0.0
        %569 = vmatmul.mubr.f32.gmra.mrb[0].mxu0 %v359
        %v570 = vpop.f32.mrb[0].mxu0
        %v571 = vadd.f32 %v219, %v570
        %v572 = vpop.f32.mrb[0].mxu0
        %573 = vmatprep.mubr.f32.mxu0 0.0
        %574 = vmatmul.mubr.f32.gmra.mrb[0].mxu0 %v362
        %v575 = vpop.f32.mrb[0].mxu0
        %v576 = vadd.f32 %v219, %v575
        %v577 = vpop.f32.mrb[0].mxu0
        %578 = vmatprep.mubr.f32.mxu0 0.0
        %579 = vmatmul.mubr.f32.gmra.mrb[0].mxu0 %v365
        %v580 = vpop.f32.mrb[0].mxu0
        %v581 = vadd.f32 %v219, %v580
        %v582 = vpop.f32.mrb[0].mxu0
        %583 = vmatprep.mubr.f32.mxu0 0.0
        %584 = vmatmul.mubr.f32.gmra.mrb[0].mxu0 %v368
        %v585 = vpop.f32.mrb[0].mxu0
        %v586 = vadd.f32 %v219, %v585
        %v587 = vpop.f32.mrb[0].mxu0
        %588 = vmatprep.mubr.f32.mxu0 0.0
        %589 = vmatmul.mubr.f32.gmra.mrb[0].mxu0 %v371
        %v590 = vpop.f32.mrb[0].mxu0
        %v591 = vadd.f32 %v219, %v590
        %v592 = vpop.f32.mrb[0].mxu0
        %593 = vmatprep.mubr.f32.mxu0 0.0
        %594 = vmatmul.mubr.f32.gmra.mrb[0].mxu0 %v374
        %v595 = vpop.f32.mrb[0].mxu0
        %v596 = vadd.f32 %v219, %v595
        %v597 = vpop.f32.mrb[0].mxu0
        %598 = vmatprep.mubr.f32.mxu0 0.0
        %599 = vmatmul.mubr.f32.gmra.mrb[0].mxu0 %v377
        %v600 = vpop.f32.mrb[0].mxu0
        %v601 = vadd.f32 %v219, %v600
        %v602 = vpop.f32.mrb[0].mxu0
        %603 = vmatprep.mubr.f32.mxu0 0.0
        %604 = vmatmul.mubr.f32.gmra.mrb[0].mxu0 %v380
        %v605 = vpop.f32.mrb[0].mxu0
        %v606 = vadd.f32 %v219, %v605
        %v607 = vpop.f32.mrb[0].mxu0
        %608 = vmatprep.mubr.f32.mxu0 0.0
        %609 = vmatmul.mubr.f32.gmra.mrb[0].mxu0 %v383
        %v610 = vpop.f32.mrb[0].mxu0
        %v611 = vadd.f32 %v219, %v610
        %v612 = vpop.f32.mrb[0].mxu0
        %613 = vdwg.mxu0
        %v614 = vmax.f32 %v456, 0.0
        %v615 = vmax.f32 %v461, 0.0
        %v616 = vmax.f32 %v466, 0.0
        %v617 = vmax.f32 %v471, 0.0
        %v618 = vmax.f32 %v476, 0.0
        %v619 = vmax.f32 %v481, 0.0
        %v620 = vmax.f32 %v486, 0.0
        %v621 = vmax.f32 %v491, 0.0
        %v622 = vmax.f32 %v496, 0.0
        %v623 = vmax.f32 %v501, 0.0
        %v624 = vmax.f32 %v506, 0.0
        %v625 = vmax.f32 %v511, 0.0
        %v626 = vmax.f32 %v516, 0.0
        %v627 = vmax.f32 %v521, 0.0
        %v628 = vmax.f32 %v526, 0.0
        %v629 = vmax.f32 %v531, 0.0
        %v630 = vmax.f32 %v536, 0.0
        %v631 = vmax.f32 %v541, 0.0
        %v632 = vmax.f32 %v546, 0.0
        %v633 = vmax.f32 %v551, 0.0
        %v634 = vmax.f32 %v556, 0.0
        %v635 = vmax.f32 %v561, 0.0
        %v636 = vmax.f32 %v566, 0.0
        %v637 = vmax.f32 %v571, 0.0
        %v638 = vmax.f32 %v576, 0.0
        %v639 = vmax.f32 %v581, 0.0
        %v640 = vmax.f32 %v586, 0.0
        %v641 = vmax.f32 %v591, 0.0
        %v642 = vmax.f32 %v596, 0.0
        %v643 = vmax.f32 %v601, 0.0
        %v644 = vmax.f32 %v606, 0.0
        %v645 = vmax.f32 %v611, 0.0
        %s646 = scalar_lea.vmem [#allocation2], %s23
        %v647 = vld [vmem:[%s646] sm:$0x1]
        %vm648 = vcmask 261120
        %v649 = vsel %vm648, %v614, 0.0
        %v650 = vsel %vm648, %v615, 0.0
        %v651 = vadd.f32 %v649, %v650
        %v652 = vsel %vm648, %v616, 0.0
        %v653 = vadd.f32 %v651, %v652
        %v654 = vsel %vm648, %v617, 0.0
        %v655 = vadd.f32 %v653, %v654
        %v656 = vsel %vm648, %v618, 0.0
        %v657 = vadd.f32 %v655, %v656
        %v658 = vsel %vm648, %v619, 0.0
        %v659 = vadd.f32 %v657, %v658
        %v660 = vsel %vm648, %v620, 0.0
        %v661 = vadd.f32 %v659, %v660
        %v662 = vsel %vm648, %v621, 0.0
        %v663 = vadd.f32 %v661, %v662
        %v664 = vsel %vm648, %v622, 0.0
        %v665 = vadd.f32 %v663, %v664
        %v666 = vsel %vm648, %v623, 0.0
        %v667 = vadd.f32 %v665, %v666
        %v668 = vsel %vm648, %v624, 0.0
        %v669 = vadd.f32 %v667, %v668
        %v670 = vsel %vm648, %v625, 0.0
        %v671 = vadd.f32 %v669, %v670
        %v672 = vsel %vm648, %v626, 0.0
        %v673 = vadd.f32 %v671, %v672
        %v674 = vsel %vm648, %v627, 0.0
        %v675 = vadd.f32 %v673, %v674
        %v676 = vsel %vm648, %v628, 0.0
        %v677 = vadd.f32 %v675, %v676
        %v678 = vsel %vm648, %v629, 0.0
        %v679 = vadd.f32 %v677, %v678
        %v680 = vsel %vm648, %v630, 0.0
        %v681 = vadd.f32 %v679, %v680
        %v682 = vsel %vm648, %v631, 0.0
        %v683 = vadd.f32 %v681, %v682
        %v684 = vsel %vm648, %v632, 0.0
        %v685 = vadd.f32 %v683, %v684
        %v686 = vsel %vm648, %v633, 0.0
        %v687 = vadd.f32 %v685, %v686
        %v688 = vsel %vm648, %v634, 0.0
        %v689 = vadd.f32 %v687, %v688
        %v690 = vsel %vm648, %v635, 0.0
        %v691 = vadd.f32 %v689, %v690
        %v692 = vsel %vm648, %v636, 0.0
        %v693 = vadd.f32 %v691, %v692
        %v694 = vsel %vm648, %v637, 0.0
        %v695 = vadd.f32 %v693, %v694
        %v696 = vsel %vm648, %v638, 0.0
        %v697 = vadd.f32 %v695, %v696
        %v698 = vsel %vm648, %v639, 0.0
        %v699 = vadd.f32 %v697, %v698
        %v700 = vsel %vm648, %v640, 0.0
        %v701 = vadd.f32 %v699, %v700
        %v702 = vsel %vm648, %v641, 0.0
        %v703 = vadd.f32 %v701, %v702
        %v704 = vsel %vm648, %v642, 0.0
        %v705 = vadd.f32 %v703, %v704
        %v706 = vsel %vm648, %v643, 0.0
        %v707 = vadd.f32 %v705, %v706
        %v708 = vsel %vm648, %v644, 0.0
        %v709 = vadd.f32 %v707, %v708
        %v710 = vsel %vm648, %v645, 0.0
        %v711 = vadd.f32 %v709, %v710
        %v712 = vrot.slane %v711, 4
        %v713 = vadd.f32 %v711, %v712
        %v714 = vrot.slane %v713, 2
        %v715 = vadd.f32 %v713, %v714
        %v716 = vrot.slane %v715, 1
        %v717 = vadd.f32 %v715, %v716
        %v718 = vadd.f32 %v647, %v717
        %vm719 = vcmask 253952
        %720 = vst.msk [vmem:[%s646] sm:$0x1] %vm719, %v718
        %p721 = scmp.eq.s32.totalorder %s23, 1
        %p722 = pnand %p721, %p205
        %p723 = pneg %p722
        // Predicated region
        $region45: #{tpu_custom_call.1} parent=31 // pred_check
          _
        $region46: #{tpu_custom_call.1} parent=31 // pred_check_branch
          %725 = sbr.rel (%p722) target = $region48
        $region47: #{tpu_custom_call.1} parent=31 // pred_region
          %v726 = vld [vmem:[#allocation2] sm:$0x3]
          %v727 = vmul.f32 %v726, 0.00390625
          %vm728 = vcmask 254976
          %729 = vst.msk [vmem:[#allocation8] sm:$0x3] %vm728, %v727
        $region48: #{tpu_custom_call.1} parent=31 // pred_fallthru
          _
        // Predicated region
        $region49: #{tpu_custom_call.1} parent=31 // pred_check
          %p730 = pneg %p114
        $region50: #{tpu_custom_call.1} parent=31 // pred_check_branch
          %732 = sbr.rel (%p730) target = $region52
        $region51: #{tpu_custom_call.1} parent=31 // pred_region
          %s734 = ssub.s32 32, 32
          %735 = vsyncadd [#allocation5], %s734
          %s737 = sshll.u32 [#allocation8], 4
          %s738 = int_to_ptr.vmem [resolvable:$true] %s737
          %740 = dma.vmem_to_hbm [thread:$0]  %s738, 32, %s3, [#allocation5]
        $region52: #{tpu_custom_call.1} parent=31 // pred_fallthru
          _
        // Predicated region
        $region53: #{tpu_custom_call.1} parent=31 // pred_check
          %p741 = pneg %p114
        $region54: #{tpu_custom_call.1} parent=31 // pred_check_branch
          %743 = sbr.rel (%p741) target = $region56
        $region55: #{tpu_custom_call.1} parent=31 // pred_region
          %744 = dma.done [#allocation5], 32
        $region56: #{tpu_custom_call.1} parent=31 // pred_fallthru
          _
      $region32: #{tpu_custom_call.1} parent=5 // pred_fallthru
        _
      %p745 = scmp.le.s32.totalorder 2, %s14
      // Predicated region
      $region57: #{tpu_custom_call.1} parent=5 // pred_check
        %p746 = pneg %p745
      $region58: #{tpu_custom_call.1} parent=5 // pred_check_branch
        %748 = sbr.rel (%p746) target = $region60
      $region59: #{tpu_custom_call.1} parent=5 // pred_region
        %s749 = ssub.s32 %s14, 2
      $region60: #{tpu_custom_call.1} parent=5 // pred_fallthru
        _
    $region6: #{tpu_custom_call.1} parent=1 // loop_footer
      %s18 = sadd.s32 1, %s14
    $region7: #{tpu_custom_call.1} parent=1 // loop_footer_branch
      %13 = sbr.rel target = $region3
    $region8: #{tpu_custom_call.1} parent=1 // loop_exit
      _
    %750 = vsyncpa [#allocation4], 1
    %s751 = scalar_lea.sflag [#allocation4], 1
    %752 = vsyncpa %s751, 1
    %753 = vsyncpa [#allocation7], 1
    %754 = vsyncpa [#allocation5], 1
    %s755 = scalar_lea.sflag [#allocation5], 1
    %756 = vsyncpa %s755, 1

</llo_original>
